<compile_context>
chip_gen: v6e
topology: v6e:2x2x1
jax: 0.10.0
libtpu: 0.0.40
codegen_flags: <defaults>
</compile_context>

<pallas_src>
import functools

import jax
import jax.numpy as jnp
import numpy as np
from jax.experimental import pallas as pl
from jax.experimental.pallas import tpu as pltpu

F32 = jnp.float32


def _round_up(x, m):
    return (x + m - 1) // m * m


# ------------------------------ kernel -------------------------------------

def _f1_loss_kernel(trues_ref, preds_ref, o_ref, acc_ref, *,
                    n_rows, tm, inner_tiles, eps):
    chunk = pl.program_id(0)          # "parallel" axis (megacore on v7x)
    step = pl.program_id(1)           # "arbitrary" reduction axis within chunk

    @pl.when(step == 0)
    def _():
        acc_ref[...] = jnp.zeros_like(acc_ref)

    t = trues_ref[...].astype(F32)    # (tm, C) labels, cast in-kernel
    x = preds_ref[...]                # (tm, C) logits (any float dtype)

    # sigmoid(x) > 0.5  <=>  x > 0   (exact; no EUP exp, no divide)
    p = (x > 0).astype(F32)

    tp = jnp.sum(t * p, axis=1, keepdims=True)       # (tm, 1)
    sum_t = jnp.sum(t, axis=1, keepdims=True)
    sum_p = jnp.sum(p, axis=1, keepdims=True)
    fp = sum_p - tp
    fn = sum_t - tp
    # (tn is computed by the PyTorch module but never used in f1.)

    precision = tp / (tp + fp + eps)
    recall = tp / (tp + fn + eps)
    f1 = 2.0 * precision * recall / (precision + recall + eps)
    f1 = jnp.clip(f1, eps, 1.0 - eps)

    row0 = (chunk * inner_tiles + step) * tm
    tile_is_full = row0 + tm <= n_rows

    @pl.when(tile_is_full)
    def _():                          # steady state: completely unmasked
        acc_ref[...] += jnp.sum(f1, axis=0, keepdims=True)

    @pl.when(jnp.logical_not(tile_is_full))
    def _():                          # ragged / overhanging tile: mask rows
        rid = jax.lax.broadcasted_iota(jnp.int32, (tm, 1), 0) + row0
        acc_ref[...] += jnp.sum(jnp.where(rid < n_rows, f1, 0.0),
                                axis=0, keepdims=True)

    @pl.when(step == pl.num_programs(1) - 1)
    def _():
        # Per-chunk partial sum written at element [0,0] of a lane-dense
        # (8,128) tile (zeros elsewhere) -> the wrapper just sums everything.
        rr = jax.lax.broadcasted_iota(jnp.int32, (8, 128), 0)
        cc = jax.lax.broadcasted_iota(jnp.int32, (8, 128), 1)
        o_ref[...] = jnp.where((rr == 0) & (cc == 0), acc_ref[...], 0.0)


# ------------------------------ wrapper ------------------------------------

def f1_loss(trues, preds, *, eps=1e-7, tile_rows=None,
            vmem_input_budget_bytes=24 << 20, max_tile_rows=8192):
    assert trues.shape == preds.shape and trues.ndim == 2
    n, c = trues.shape

    t_item = jnp.dtype(trues.dtype).itemsize
    p_item = jnp.dtype(preds.dtype).itemsize
    # Sublane multiple so packed tiles stay legal (int8 -> 32, bf16 -> 16, f32 -> 8).
    sub = max(32 // t_item, 32 // p_item, 8)

    c_lanes = _round_up(c, 128)          # physical lane footprint of one row
    per_row = 2 * 2 * c_lanes * 4        # 2 inputs x 2 pipeline buffers, f32-equiv
    if tile_rows is None:
        tm = (vmem_input_budget_bytes // per_row) // sub * sub
        tm = max(sub, min(tm, max_tile_rows))
    else:
        tm = max(sub, _round_up(tile_rows, sub))
    tm = min(tm, _round_up(n, sub))      # never larger than one pass over rows

    n_tiles = -(-n // tm)
    n_chunks = 2 if n_tiles >= 2 else 1  # "parallel" axis: v7x has 2 TCs/chip
    inner_tiles = -(-n_tiles // n_chunks)

    def in_map(ci, si):
        # Clamp logical tiles past the end of the batch (possible when n_tiles
        # is odd); their rows are masked inside the kernel via row0 >= n_rows.
        return (jnp.minimum(ci * inner_tiles + si, n_tiles - 1), 0)

    bytes_in = n * c * (t_item + p_item)
    out = pl.pallas_call(
        functools.partial(_f1_loss_kernel, n_rows=n, tm=tm,
                          inner_tiles=inner_tiles, eps=float(eps)),
        out_shape=jax.ShapeDtypeStruct((n_chunks * 8, 128), F32),
        grid=(n_chunks, inner_tiles),
        in_specs=[pl.BlockSpec((tm, c), in_map),     # full-C last dim: no lane pad
                  pl.BlockSpec((tm, c), in_map)],
        out_specs=pl.BlockSpec((8, 128), lambda ci, si: (ci, 0)),
        scratch_shapes=[pltpu.VMEM((1, 1), F32)],
        compiler_params=pltpu.CompilerParams(
            dimension_semantics=("parallel", "arbitrary"),
            vmem_limit_bytes=48 * 1024 * 1024),
        cost_estimate=pl.CostEstimate(
            flops=6 * n * c,
            transcendentals=0,
            bytes_accessed=bytes_in + n_chunks * 8 * 128 * 4),
    )(trues, preds)

    # Per-chunk partials sit at [ci*8, 0]; everything else is exactly 0.
    return 1.0 - jnp.sum(out) / n


# ------------------------------ reference ----------------------------------

def reference_f1_loss(trues, preds, eps=1e-7):
    p = (jax.nn.sigmoid(preds) > 0.5).astype(F32)
    t = trues.astype(F32)
    tp = jnp.sum(t * p, axis=1)
    fp = jnp.sum((1.0 - t) * p, axis=1)
    fn = jnp.sum(t * (1.0 - p), axis=1)
    precision = tp / (tp + fp + eps)
    recall = tp / (tp + fn + eps)
    f1 = 2.0 * precision * recall / (precision + recall + eps)
    f1 = jnp.clip(f1, eps, 1.0 - eps)
    return 1.0 - jnp.mean(f1)


# ------------------------------ main ----------------------------------------

if __name__ == "__main__":
    key = jax.random.PRNGKey(0)
    kt, kp = jax.random.split(key)

    # multi-label setup: batch=8, num_labels=32 (small shapes)
    n, c = 8, 32
    trues = (jax.random.uniform(kt, (n, c)) > 0.5).astype(F32)
    preds = 2.0 * jax.random.normal(kp, (n, c), F32)

    loss = jax.jit(f1_loss)(trues, preds)
    jax.block_until_ready(loss)

    assert loss.shape == () and loss.dtype == jnp.float32
    assert np.isfinite(float(loss))
    np.testing.assert_allclose(float(loss), float(reference_f1_loss(trues, preds)),
                               rtol=1e-5, atol=1e-6)

    # shape that needs a ragged (overhanging) row tile and non-128 label dim
    k2, k3 = jax.random.split(kp)
    trues2 = (jax.random.uniform(k2, (21, 15)) > 0.5).astype(F32)
    preds2 = 2.0 * jax.random.normal(k3, (21, 15), F32)
    loss2 = jax.jit(f1_loss)(trues2, preds2)
    jax.block_until_ready(loss2)
    np.testing.assert_allclose(float(loss2), float(reference_f1_loss(trues2, preds2)),
                               rtol=1e-5, atol=1e-6)

    # multi-tile, two-chunk ("parallel") grid with an odd tile count to
    # exercise the accumulator + clamped/overhanging tile paths.
    k4, k5 = jax.random.split(k3)
    trues3 = (jax.random.uniform(k4, (40, 15)) > 0.5).astype(F32)
    preds3 = 2.0 * jax.random.normal(k5, (40, 15), F32)
    loss3 = f1_loss(trues3, preds3, tile_rows=16)
    jax.block_until_ready(loss3)
    np.testing.assert_allclose(float(loss3), float(reference_f1_loss(trues3, preds3)),
                               rtol=1e-5, atol=1e-6)

    print("KERNEL_OK")
</pallas_src>

<mosaic_0001>
module attributes {stable_mosaic.version = 11 : i64} {
  func.func @_f1_loss_kernel(%arg0: i32, %arg1: i32, %arg2: memref<8x32xf32, #tpu.memory_space<vmem>>, %arg3: memref<8x32xf32, #tpu.memory_space<vmem>>, %arg4: memref<8x128xf32, #tpu.memory_space<vmem>>, %arg5: memref<1x1xf32, #tpu.memory_space<vmem>>) attributes {dimension_semantics = [#tpu.dimension_semantics<parallel>, #tpu.dimension_semantics<arbitrary>], iteration_bounds = array<i64: 1, 1>, scalar_prefetch = 0 : i64, scratch_operands = 1 : i64, tpu.core_type = #tpu.core_type<tc>, window_params = [{transform_indices = @transform_0, window_bounds = array<i64: 8, 32>}, {transform_indices = @transform_1, window_bounds = array<i64: 8, 32>}, {transform_indices = @transform_2, window_bounds = array<i64: 8, 128>}]} {
    %c0_i32 = arith.constant 0 : i32
    %0 = arith.cmpi eq, %arg1, %c0_i32 : i32
    %1 = arith.extui %0 : i1 to i32
    %c0_i32_0 = arith.constant 0 : i32
    %2 = arith.cmpi ne, %1, %c0_i32_0 : i32
    scf.if %2 {
      %cst_19 = arith.constant 0.000000e+00 : f32
      %50 = vector.broadcast %cst_19 : f32 to vector<1x1xf32>
      %c0_20 = arith.constant 0 : index
      %c0_21 = arith.constant 0 : index
      %51 = vector.load %arg5[%c0_20, %c0_21] : memref<1x1xf32, #tpu.memory_space<vmem>>, vector<1x1xf32>
      tpu.vector_store %arg5[%c0_20, %c0_21], %50 {strides = array<i32>} : memref<1x1xf32, #tpu.memory_space<vmem>>, vector<1x1xf32>,
    } else {
    }
    %c0 = arith.constant 0 : index
    %c0_1 = arith.constant 0 : index
    %3 = vector.load %arg2[%c0, %c0_1] : memref<8x32xf32, #tpu.memory_space<vmem>>, vector<8x32xf32>
    %c0_2 = arith.constant 0 : index
    %c0_3 = arith.constant 0 : index
    %4 = vector.load %arg3[%c0_2, %c0_3] : memref<8x32xf32, #tpu.memory_space<vmem>>, vector<8x32xf32>
    %cst = arith.constant 0.000000e+00 : f32
    %5 = vector.broadcast %cst : f32 to vector<8x32xf32>
    %6 = arith.cmpf ogt, %4, %5 : vector<8x32xf32>
    %7 = arith.extui %6 : vector<8x32xi1> to vector<8x32xi32>
    %8 = arith.sitofp %7 : vector<8x32xi32> to vector<8x32xf32>
    %9 = arith.mulf %3, %8 : vector<8x32xf32>
    %cst_4 = arith.constant dense<0.000000e+00> : vector<8xf32>
    %10 = vector.multi_reduction <add>, %9, %cst_4 [1] : vector<8x32xf32> to vector<8xf32>
    %11 = vector.shape_cast %10 : vector<8xf32> to vector<8x1xf32>
    %cst_5 = arith.constant dense<0.000000e+00> : vector<8xf32>
    %12 = vector.multi_reduction <add>, %3, %cst_5 [1] : vector<8x32xf32> to vector<8xf32>
    %13 = vector.shape_cast %12 : vector<8xf32> to vector<8x1xf32>
    %cst_6 = arith.constant dense<0.000000e+00> : vector<8xf32>
    %14 = vector.multi_reduction <add>, %8, %cst_6 [1] : vector<8x32xf32> to vector<8xf32>
    %15 = vector.shape_cast %14 : vector<8xf32> to vector<8x1xf32>
    %16 = arith.subf %15, %11 : vector<8x1xf32>
    %17 = arith.subf %13, %11 : vector<8x1xf32>
    %18 = arith.addf %11, %16 : vector<8x1xf32>
    %cst_7 = arith.constant 1.000000e-07 : f32
    %19 = vector.broadcast %cst_7 : f32 to vector<8x1xf32>
    %20 = arith.addf %18, %19 : vector<8x1xf32>
    %21 = arith.divf %11, %20 : vector<8x1xf32>
    %22 = arith.addf %11, %17 : vector<8x1xf32>
    %cst_8 = arith.constant 1.000000e-07 : f32
    %23 = vector.broadcast %cst_8 : f32 to vector<8x1xf32>
    %24 = arith.addf %22, %23 : vector<8x1xf32>
    %25 = arith.divf %11, %24 : vector<8x1xf32>
    %cst_9 = arith.constant 2.000000e+00 : f32
    %26 = vector.broadcast %cst_9 : f32 to vector<8x1xf32>
    %27 = arith.mulf %26, %21 : vector<8x1xf32>
    %28 = arith.mulf %27, %25 : vector<8x1xf32>
    %29 = arith.addf %21, %25 : vector<8x1xf32>
    %cst_10 = arith.constant 1.000000e-07 : f32
    %30 = vector.broadcast %cst_10 : f32 to vector<8x1xf32>
    %31 = arith.addf %29, %30 : vector<8x1xf32>
    %32 = arith.divf %28, %31 : vector<8x1xf32>
    %cst_11 = arith.constant 1.000000e-07 : f32
    %cst_12 = arith.constant 0.99999988 : f32
    %33 = vector.broadcast %cst_11 : f32 to vector<8x1xf32>
    %34 = arith.maximumf %33, %32 : vector<8x1xf32>
    %35 = vector.broadcast %cst_12 : f32 to vector<8x1xf32>
    %36 = arith.minimumf %35, %34 : vector<8x1xf32>
    %c1_i32 = arith.constant 1 : i32
    %37 = arith.muli %arg0, %c1_i32 : i32
    %38 = arith.addi %37, %arg1 : i32
    %c8_i32 = arith.constant 8 : i32
    %39 = arith.muli %38, %c8_i32 : i32
    %c8_i32_13 = arith.constant 8 : i32
    %40 = arith.addi %39, %c8_i32_13 : i32
    %c8_i32_14 = arith.constant 8 : i32
    %41 = arith.cmpi sle, %40, %c8_i32_14 : i32
    %42 = arith.extui %41 : i1 to i32
    %c0_i32_15 = arith.constant 0 : i32
    %43 = arith.cmpi ne, %42, %c0_i32_15 : i32
    scf.if %43 {
      %c0_19 = arith.constant 0 : index
      %c0_20 = arith.constant 0 : index
      %50 = vector.load %arg5[%c0_19, %c0_20] : memref<1x1xf32, #tpu.memory_space<vmem>>, vector<1x1xf32>
      %cst_21 = arith.constant dense<0.000000e+00> : vector<1xf32>
      %51 = vector.multi_reduction <add>, %36, %cst_21 [0] : vector<8x1xf32> to vector<1xf32>
      %52 = vector.shape_cast %51 : vector<1xf32> to vector<1x1xf32>
      %53 = arith.addf %50, %52 : vector<1x1xf32>
      %c0_22 = arith.constant 0 : index
      %c0_23 = arith.constant 0 : index
      %54 = vector.load %arg5[%c0_22, %c0_23] : memref<1x1xf32, #tpu.memory_space<vmem>>, vector<1x1xf32>
      tpu.vector_store %arg5[%c0_22, %c0_23], %53 {strides = array<i32>} : memref<1x1xf32, #tpu.memory_space<vmem>>, vector<1x1xf32>,
    } else {
    }
    %true = arith.constant true
    %44 = arith.xori %41, %true : i1
    %45 = arith.extui %44 : i1 to i32
    %c0_i32_16 = arith.constant 0 : i32
    %46 = arith.cmpi ne, %45, %c0_i32_16 : i32
    scf.if %46 {
      %50 = tpu.iota {dimensions = array<i32: 0>} : vector<8x1xi32>
      %51 = vector.broadcast %39 : i32 to vector<8x1xi32>
      %52 = arith.addi %50, %51 : vector<8x1xi32>
      %c0_19 = arith.constant 0 : index
      %c0_20 = arith.constant 0 : index
      %53 = vector.load %arg5[%c0_19, %c0_20] : memref<1x1xf32, #tpu.memory_space<vmem>>, vector<1x1xf32>
      %c8_i32_21 = arith.constant 8 : i32
      %54 = vector.broadcast %c8_i32_21 : i32 to vector<8x1xi32>
      %55 = arith.cmpi slt, %52, %54 : vector<8x1xi32>
      %cst_22 = arith.constant 0.000000e+00 : f32
      %56 = vector.broadcast %cst_22 : f32 to vector<8x1xf32>
      %57 = arith.select %55, %36, %56 : vector<8x1xi1>, vector<8x1xf32>
      %cst_23 = arith.constant dense<0.000000e+00> : vector<1xf32>
      %58 = vector.multi_reduction <add>, %57, %cst_23 [0] : vector<8x1xf32> to vector<1xf32>
      %59 = vector.shape_cast %58 : vector<1xf32> to vector<1x1xf32>
      %60 = arith.addf %53, %59 : vector<1x1xf32>
      %c0_24 = arith.constant 0 : index
      %c0_25 = arith.constant 0 : index
      %61 = vector.load %arg5[%c0_24, %c0_25] : memref<1x1xf32, #tpu.memory_space<vmem>>, vector<1x1xf32>
      tpu.vector_store %arg5[%c0_24, %c0_25], %60 {strides = array<i32>} : memref<1x1xf32, #tpu.memory_space<vmem>>, vector<1x1xf32>,
    } else {
    }
    %c0_i32_17 = arith.constant 0 : i32
    %47 = arith.cmpi eq, %arg1, %c0_i32_17 : i32
    %48 = arith.extui %47 : i1 to i32
    %c0_i32_18 = arith.constant 0 : i32
    %49 = arith.cmpi ne, %48, %c0_i32_18 : i32
    scf.if %49 {
      %50 = tpu.iota {dimensions = array<i32: 0>} : vector<8x128xi32>
      %51 = tpu.iota {dimensions = array<i32: 1>} : vector<8x128xi32>
      %c0_i32_19 = arith.constant 0 : i32
      %52 = vector.broadcast %c0_i32_19 : i32 to vector<8x128xi32>
      %53 = arith.cmpi eq, %50, %52 : vector<8x128xi32>
      %c0_i32_20 = arith.constant 0 : i32
      %54 = vector.broadcast %c0_i32_20 : i32 to vector<8x128xi32>
      %55 = arith.cmpi eq, %51, %54 : vector<8x128xi32>
      %56 = arith.andi %53, %55 : vector<8x128xi1>
      %c0_21 = arith.constant 0 : index
      %c0_22 = arith.constant 0 : index
      %57 = vector.load %arg5[%c0_21, %c0_22] : memref<1x1xf32, #tpu.memory_space<vmem>>, vector<1x1xf32>
      %cst_23 = arith.constant 0.000000e+00 : f32
      %58 = vector.shape_cast %57 : vector<1x1xf32> to vector<1x1xf32>
      %59 = vector.broadcast %58 : vector<1x1xf32> to vector<8x128xf32>
      %60 = vector.broadcast %cst_23 : f32 to vector<8x128xf32>
      %61 = arith.select %56, %59, %60 : vector<8x128xi1>, vector<8x128xf32>
      %c0_24 = arith.constant 0 : index
      %c0_25 = arith.constant 0 : index
      %62 = vector.load %arg4[%c0_24, %c0_25] : memref<8x128xf32, #tpu.memory_space<vmem>>, vector<8x128xf32>
      tpu.vector_store %arg4[%c0_24, %c0_25], %61 {strides = array<i32>} : memref<8x128xf32, #tpu.memory_space<vmem>>, vector<8x128xf32>,
    } else {
    }
    return
  }
  func.func @transform_0(%arg0: i32, %arg1: i32) -> (i32, i32) {
    %c1_i32 = arith.constant 1 : i32
    %0 = arith.muli %arg0, %c1_i32 : i32
    %1 = arith.addi %0, %arg1 : i32
    %c0_i32 = arith.constant 0 : i32
    %2 = arith.minsi %1, %c0_i32 : i32
    %c0_i32_0 = arith.constant 0 : i32
    %c0_i32_1 = arith.constant 0 : i32
    return %2, %c0_i32_0 : i32, i32
  }
  func.func @transform_1(%arg0: i32, %arg1: i32) -> (i32, i32) {
    %c1_i32 = arith.constant 1 : i32
    %0 = arith.muli %arg0, %c1_i32 : i32
    %1 = arith.addi %0, %arg1 : i32
    %c0_i32 = arith.constant 0 : i32
    %2 = arith.minsi %1, %c0_i32 : i32
    %c0_i32_0 = arith.constant 0 : i32
    %c0_i32_1 = arith.constant 0 : i32
    return %2, %c0_i32_0 : i32, i32
  }
  func.func @transform_2(%arg0: i32, %arg1: i32) -> (i32, i32) {
    %c0_i32 = arith.constant 0 : i32
    %c0_i32_0 = arith.constant 0 : i32
    return %arg0, %c0_i32 : i32, i32
  }
}

</mosaic_0001>

<llo_original>
// kernel: f1_loss.1
$region0: #{f1_loss.1}
  #allocation0 [shape = 'u32[]', space=smem, size = 0x4, offset = 0x4, fixed_abs, tag = 'smem constant byte address 0x4 - core index']
  #allocation1 [shape = 'u32[144,128]{1,0:T(1,128)}', space=vmem, size = 0x12000, scoped, tag = 'internal scratch']
  #allocation2 [shape = 'f32[1,1]{1,0:T(1,128)}', space=vmem, size = 0x200, scoped, tag = 'scratch operand']
  %s0 = inlined_call_operand.hbm [shape: f32[8,32], index: 0, kind: input, shape index: {}]
  %s1 = inlined_call_operand.hbm [shape: f32[8,32], index: 1, kind: input, shape index: {}]
  %s2 = inlined_call_operand.vmem [shape: f32[8,128], index: 2, kind: output, shape index: {}]
  %s3 = sld [smem:[#allocation0]]
  $region42: #{f1_loss.1} parent=0
    _
  %s5 = ssub.s32 1, %s3
  %s6 = scalar_select 0, %s5, %s3
  $region1: #{f1_loss.1} parent=0
    #allocation3 [shape = 'u8[4096]{0}', space=vmem, size = 0x1000, scoped, tag = 'input window, operand 0, single buffered']
    #allocation4 [shape = 's32[1]{0}', space=sflag, size = 0x4, scoped, tag = 'scoped memory for f1_loss.1']
    #allocation5 [shape = 'u8[4096]{0}', space=vmem, size = 0x1000, scoped, tag = 'input window, operand 1, single buffered']
    #allocation6 [shape = 's32[1]{0}', space=sflag, size = 0x4, scoped, tag = 'scoped memory for f1_loss.1']
    %7 = vsyncpa [#allocation4], 0
    %8 = vsyncpa [#allocation6], 0
    // Predicated region
    $region2: #{f1_loss.1} parent=1 // pred_check
      _
    $region3: #{f1_loss.1} parent=1 // pred_check_branch
      %10 = sbr.rel (0) target = $region5
    $region4: #{f1_loss.1} parent=1 // pred_region
      %s11 = sadd.s32 0, 0
      %p12 = scmp.lt.s32.totalorder %s11, 0
      %s13 = scalar_select %p12, %s11, 0
      %s15 = ssub.s32 128, 128
      %16 = vsyncadd [#allocation4], %s15
      %s17 = smul.addr %s13, 128
      %s18 = scalar_lea.hbm %s0, %s17
      %s20 = sshll.u32 [#allocation3], 4
      %s21 = int_to_ptr.vmem [resolvable:$true] %s20
      %23 = dma.hbm_to_vmem [thread:$0]  %s18, 128, %s21, [#allocation4]
    $region5: #{f1_loss.1} parent=1 // pred_fallthru
      _
    // Predicated region
    $region6: #{f1_loss.1} parent=1 // pred_check
      _
    $region7: #{f1_loss.1} parent=1 // pred_check_branch
      %25 = sbr.rel (0) target = $region9
    $region8: #{f1_loss.1} parent=1 // pred_region
      %s26 = sadd.s32 0, 0
      %p27 = scmp.lt.s32.totalorder %s26, 0
      %s28 = scalar_select %p27, %s26, 0
      %s30 = ssub.s32 128, 128
      %31 = vsyncadd [#allocation6], %s30
      %s32 = smul.addr %s28, 128
      %s33 = scalar_lea.hbm %s1, %s32
      %s35 = sshll.u32 [#allocation5], 4
      %s36 = int_to_ptr.vmem [resolvable:$true] %s35
      %38 = dma.hbm_to_vmem [thread:$0]  %s33, 128, %s36, [#allocation6]
    $region9: #{f1_loss.1} parent=1 // pred_fallthru
      _
    // Predicated region
    $region10: #{f1_loss.1} parent=1 // pred_check
      _
    $region11: #{f1_loss.1} parent=1 // pred_check_branch
      %40 = sbr.rel (0) target = $region13
    $region12: #{f1_loss.1} parent=1 // pred_region
      %41 = dma.done [#allocation4], 128
    $region13: #{f1_loss.1} parent=1 // pred_fallthru
      _
    // Predicated region
    $region14: #{f1_loss.1} parent=1 // pred_check
      _
    $region15: #{f1_loss.1} parent=1 // pred_check_branch
      %43 = sbr.rel (0) target = $region17
    $region16: #{f1_loss.1} parent=1 // pred_region
      %44 = dma.done [#allocation6], 128
    $region17: #{f1_loss.1} parent=1 // pred_fallthru
      _
    %s45 = sadd.s32 0, 0
    %p46 = scmp.lt.s32.totalorder %s45, 0
    %s47 = scalar_select %p46, %s45, 0
    %s48 = sadd.s32 0, 0
    %p49 = scmp.lt.s32.totalorder %s48, 0
    %s50 = scalar_select %p49, %s48, 0
    %p51 = scmp.eq.s32.totalorder 0, 0
    // Predicated region
    $region18: #{f1_loss.1} parent=1 // pred_check
      %p52 = pneg %p51
    $region19: #{f1_loss.1} parent=1 // pred_check_branch
      %54 = sbr.rel (%p52) target = $region21
    $region20: #{f1_loss.1} parent=1 // pred_region
      %vm55 = vcmask 0
      %56 = vst.msk [vmem:[#allocation2] sm:$0x1] %vm55, 0.0
    $region21: #{f1_loss.1} parent=1 // pred_fallthru
      _
    %v57 = vld [vmem:[#allocation3] sm:$0xff]
    %v58 = vld [vmem:[#allocation5] sm:$0xff]
    %vm59 = vcmp.gt.f32.partialorder %v58, 0.0
    %v60 = vsel %vm59, 1, 0
    %v61 = vcvt.s32.f32 %v60
    %v62 = vmul.f32 %v57, %v61
    %vm63 = vcmask 261120
    %v64 = vsel %vm63, %v62, 0.0
    %65 = vadd.xlane.f32.xlu0 %v64
    %v66 = vpop.xlane.xlu0 %65
    %v67 = vsel %vm63, %v57, 0.0
    %68 = vadd.xlane.f32.xlu0 %v67
    %v69 = vpop.xlane.xlu0 %68
    %v70 = vsel %vm63, %v61, 0.0
    %71 = vadd.xlane.f32.xlu0 %v70
    %v72 = vpop.xlane.xlu0 %71
    %v73 = vsub.f32 %v72, %v66
    %v74 = vsub.f32 %v69, %v66
    %v75 = vadd.f32 %v66, %v73
    %v76 = vadd.f32 %v75, 1e-07
    %v77 = vrcp.pop %v76
    %v78 = vmul.f32 %v66, %v77
    %v79 = vadd.f32 %v66, %v74
    %v80 = vadd.f32 %v79, 1e-07
    %v81 = vrcp.pop %v80
    %v82 = vmul.f32 %v66, %v81
    %v83 = vmul.f32 %v78, 2.0
    %v84 = vmul.f32 %v83, %v82
    %v85 = vadd.f32 %v78, %v82
    %v86 = vadd.f32 %v85, 1e-07
    %v87 = vrcp.pop %v86
    %v88 = vmul.f32 %v84, %v87
    %v89 = vmax.f32 %v88, 1e-07
    %v90 = vmin.f32 %v89, 0.9999999
    %s91 = sadd.s32 0, 0
    %s92 = smul.u32 %s91, 8
    %s93 = sadd.s32 %s92, 8
    %p94 = scmp.le.s32.totalorder %s93, 8
    // Predicated region
    $region22: #{f1_loss.1} parent=1 // pred_check
      %p95 = pneg %p94
    $region23: #{f1_loss.1} parent=1 // pred_check_branch
      %97 = sbr.rel (%p95) target = $region25
    $region24: #{f1_loss.1} parent=1 // pred_region
      %v98 = vld [vmem:[#allocation2] sm:$0x1]
      %v99 = vrot.slane %v90, 4
      %v100 = vadd.f32 %v90, %v99
      %v101 = vrot.slane %v100, 2
      %v102 = vadd.f32 %v100, %v101
      %v103 = vrot.slane %v102, 1
      %v104 = vadd.f32 %v102, %v103
      %v105 = vadd.f32 %v98, %v104
      %vm106 = vcmask 0
      %107 = vst.msk [vmem:[#allocation2] sm:$0x1] %vm106, %v105
    $region25: #{f1_loss.1} parent=1 // pred_fallthru
      _
    %p108 = scmp.gt.s32.totalorder %s93, 8
    // Predicated region
    $region26: #{f1_loss.1} parent=1 // pred_check
      %p109 = pneg %p108
    $region27: #{f1_loss.1} parent=1 // pred_check_branch
      %111 = sbr.rel (%p109) target = $region29
    $region28: #{f1_loss.1} parent=1 // pred_region
      %v112 = vlaneseq
      %v113 = vshrl.u32 %v112, 7
      %v114 = vstv %s92
      %v115 = vadd.s32 %v113, %v114
      %v116 = vld [vmem:[#allocation2] sm:$0x1]
      %vm117 = vcmp.lt.s32.totalorder %v115, 8
      %v118 = vsel %vm117, %v90, 0.0
      %v119 = vrot.slane %v118, 4
      %v120 = vadd.f32 %v118, %v119
      %v121 = vrot.slane %v120, 2
      %v122 = vadd.f32 %v120, %v121
      %v123 = vrot.slane %v122, 1
      %v124 = vadd.f32 %v122, %v123
      %v125 = vadd.f32 %v116, %v124
      %vm126 = vcmask 0
      %127 = vst.msk [vmem:[#allocation2] sm:$0x1] %vm126, %v125
    $region29: #{f1_loss.1} parent=1 // pred_fallthru
      _
    // Predicated region
    $region30: #{f1_loss.1} parent=1 // pred_check
      %p128 = pneg %p51
    $region31: #{f1_loss.1} parent=1 // pred_check_branch
      %130 = sbr.rel (%p128) target = $region33
    $region32: #{f1_loss.1} parent=1 // pred_region
      %v131 = vlaneseq
      %v132 = vshrl.u32 %v131, 7
      %v133 = vlaneseq
      %v134 = vand.u32 %v133, 127
      %vm135 = vcmp.eq.s32.totalorder %v132, 0
      %vm136 = vcmp.eq.s32.totalorder %v134, 0
      %vm137 = vmand %vm135, %vm136
      %v138 = vld [vmem:[#allocation2] sm:$0x1]
      %v140 = vlaneseq
      %v141 = vshrl.u32 %v140, 7
      %v142 = vsub.s32 0, %v141
      %v143 = vrot.slane %v138, %v142
      %144 = vset.pattern.permute.xlu0 0
      %145 = vperm.xlu0 %144, %v143
      %v146 = vpop.permute.xlu0 %145
      %v148 = vsel %vm137, %v146, 0.0
      %149 = vst [vmem:[%s2] sm:$0xff] %v148
    $region33: #{f1_loss.1} parent=1 // pred_fallthru
      _
    // Predicated region
    $region34: #{f1_loss.1} parent=1 // pred_check
      _
    $region35: #{f1_loss.1} parent=1 // pred_check_branch
      %151 = sbr.rel (0) target = $region37
    $region36: #{f1_loss.1} parent=1 // pred_region
      _
    $region37: #{f1_loss.1} parent=1 // pred_fallthru
      _
    // Predicated region
    $region38: #{f1_loss.1} parent=1 // pred_check
      _
    $region39: #{f1_loss.1} parent=1 // pred_check_branch
      %153 = sbr.rel (0) target = $region41
    $region40: #{f1_loss.1} parent=1 // pred_region
      _
    $region41: #{f1_loss.1} parent=1 // pred_fallthru
      _
    %154 = vsyncpa [#allocation4], 1
    %155 = vsyncpa [#allocation6], 1

</llo_original>
